<compile_context>
chip_gen: v7x
topology: tpu7x:2x2x1
jax: 0.10.0
libtpu: 0.0.40
codegen_flags: <defaults>
</compile_context>

<pallas_src>
import math

import jax
import jax.numpy as jnp
from jax.experimental import pallas as pl
from jax.experimental.pallas import tpu as pltpu


def _round_up(x: int, m: int) -> int:
    return ((x + m - 1) // m) * m


def _choose_tile(dim: int, target: int, align: int):
    """Return (tile, padded_dim) with tile | padded_dim and tile % align == 0."""
    d = _round_up(dim, align)
    if d <= target:
        return d, d
    t = _round_up(target, align)
    return t, _round_up(d, t)


def _pad2(a, rows: int, cols: int):
    pr, pc = rows - a.shape[0], cols - a.shape[1]
    if pr == 0 and pc == 0:
        return a
    return jnp.pad(a, ((0, pr), (0, pc)))


def _linear_lora_kernel(x_ref, w_ref, b_ref, mid_ref, wb_ref, o_ref, acc_ref):
    k = pl.program_id(2)

    @pl.when(k == 0)
    def _init():
        acc_ref[...] = jnp.zeros_like(acc_ref)

    # Hot loop: a single MXU contraction per K step (bf16 in, f32 accumulate).
    acc_ref[...] += jnp.dot(x_ref[...], w_ref[...],
                            preferred_element_type=jnp.float32)

    @pl.when(k == pl.num_programs(2) - 1)
    def _finalize():
        # Tiny rank-depth epilogue matmul; alpha is already folded into mid_ref.
        lora = jnp.dot(mid_ref[...], wb_ref[...],
                       preferred_element_type=jnp.float32)
        o_ref[...] = (acc_ref[...] + b_ref[...] + lora).astype(o_ref.dtype)


def linear_with_lora(x, w_t, b, w_a, w_b, alpha, *,
                     compute_dtype=jnp.bfloat16,
                     out_dtype=None,
                     tm_target=512, tn_target=512, tk_target=1024):
    """Fused LinearWithLoRA forward.

    x:   (B, in_dim)
    w_t: (in_dim, out_dim)   -- nn.Linear weight pre-transposed at setup time
    b:   (out_dim,)
    w_a: (in_dim, rank)
    w_b: (rank, out_dim)
    alpha: scalar (python float or jnp scalar)
    Returns (B, out_dim) in out_dtype (defaults to x.dtype).
    """
    B, in_dim = x.shape
    out_dim = w_t.shape[1]
    rank = w_a.shape[1]
    assert w_t.shape == (in_dim, out_dim)
    assert w_a.shape == (in_dim, rank) and w_b.shape == (rank, out_dim)
    assert b.shape == (out_dim,)
    out_dtype = x.dtype if out_dtype is None else out_dtype

    # Sublane alignment follows the compute dtype packing (8 f32 / 16 bf16).
    sub = 8 * (4 // jnp.dtype(compute_dtype).itemsize)

    tm, m_pad = _choose_tile(B, tm_target, sub)
    tn, n_pad = _choose_tile(out_dim, tn_target, 128)
    tk, k_pad = _choose_tile(in_dim, tk_target, 128)
    # v7x megacore: when the batch fits a single M tile, make sure the N axis
    # has at least 2 tiles so both TensorCores get grid work.
    if m_pad // tm < 2 and n_pad // tn < 2 and tn > 128:
        tn = max(128, _round_up(tn // 2, 128))
        n_pad = _round_up(out_dim, tn)
    r_pad = _round_up(rank, 128)   # lane-dense epilogue operand

    alpha_f32 = jnp.asarray(alpha, jnp.float32)

    xc = x.astype(compute_dtype)
    wc = w_t.astype(compute_dtype)
    wac = w_a.astype(compute_dtype)
    wbc = w_b.astype(compute_dtype)

    # LoRA mid product hoisted out of the kernel: one tiny (B, rank) GEMM,
    # computed once (not per N tile / K step); alpha folded in here.
    mid = (jnp.dot(xc, wac, preferred_element_type=jnp.float32)
           * alpha_f32).astype(compute_dtype)

    # Zero-pad to tile boundaries (zeros contribute nothing to the contractions).
    xp = _pad2(xc, m_pad, k_pad)
    wp = _pad2(wc, k_pad, n_pad)
    bp = _pad2(b.astype(jnp.float32).reshape(1, out_dim), 1, n_pad)
    midp = _pad2(mid, m_pad, r_pad)
    wbp = _pad2(wbc, r_pad, n_pad)

    grid = (m_pad // tm, n_pad // tn, k_pad // tk)

    out = pl.pallas_call(
        _linear_lora_kernel,
        out_shape=jax.ShapeDtypeStruct((m_pad, n_pad), out_dtype),
        grid_spec=pltpu.PrefetchScalarGridSpec(
            num_scalar_prefetch=0,
            grid=grid,
            in_specs=[
                pl.BlockSpec((tm, tk), lambda i, j, k: (i, k)),      # x
                pl.BlockSpec((tk, tn), lambda i, j, k: (k, j)),      # W (in, out)
                pl.BlockSpec((1, tn), lambda i, j, k: (0, j)),       # bias (f32)
                pl.BlockSpec((tm, r_pad), lambda i, j, k: (i, 0)),   # alpha*(x@W_a)
                pl.BlockSpec((r_pad, tn), lambda i, j, k: (0, j)),   # W_b
            ],
            out_specs=pl.BlockSpec((tm, tn), lambda i, j, k: (i, j)),
            scratch_shapes=[
                pltpu.VMEM((tm, tn), jnp.float32),   # f32 base accumulator
            ],
        ),
        compiler_params=pltpu.CompilerParams(
            dimension_semantics=("parallel", "parallel", "arbitrary"),
            vmem_limit_bytes=48 * 1024 * 1024,   # stays inside v7x's 64 MiB/TC
        ),
    )(xp, wp, bp, midp, wbp)

    return out[:B, :out_dim]


if __name__ == "__main__":
    # Small but tiling-exercising shapes: grid = (1, 3, 2) with tm=16, tn=128, tk=256.
    B, in_dim, out_dim, rank = 16, 512, 384, 4
    alpha = 2.0

    key = jax.random.PRNGKey(0)
    k_x, k_w, k_b, k_a, k_wb = jax.random.split(key, 5)

    x = jax.random.normal(k_x, (B, in_dim), dtype=jnp.float32)
    # nn.Linear weight is (out, in); transpose ONCE at parameter setup time.
    w = jax.random.normal(k_w, (out_dim, in_dim), dtype=jnp.float32) / math.sqrt(in_dim)
    bias = jax.random.normal(k_b, (out_dim,), dtype=jnp.float32) * 0.1
    w_a = jax.random.normal(k_a, (in_dim, rank), dtype=jnp.float32) / math.sqrt(rank)
    # The module initializes W_b to zeros; use small random values so the LoRA
    # path is actually exercised by the correctness check.
    w_b = jax.random.normal(k_wb, (rank, out_dim), dtype=jnp.float32) * 0.05

    w_t = jnp.asarray(w.T)   # stored pre-transposed; not recomputed per call

    out = linear_with_lora(x, w_t, bias, w_a, w_b, alpha,
                           out_dtype=jnp.float32,
                           tm_target=256, tn_target=128, tk_target=256)
    out = jax.block_until_ready(out)

    # Pure-JAX f32 reference (identical semantics to the PyTorch forward).
    ref = x @ w.T + bias + alpha * ((x @ w_a) @ w_b)
    assert out.shape == (B, out_dim)
    # Operands are computed in bf16 with f32 accumulation -> bf16-level tolerance.
    assert jnp.allclose(out, ref, atol=1e-1, rtol=5e-2), "mismatch vs reference"

    print("KERNEL_OK")
</pallas_src>

<mosaic_0001>
module attributes {stable_mosaic.version = 11 : i64} {
  func.func @_linear_lora_kernel(%arg0: i32, %arg1: i32, %arg2: i32, %arg3: memref<16x256xbf16, #tpu.memory_space<vmem>>, %arg4: memref<256x128xbf16, #tpu.memory_space<vmem>>, %arg5: memref<1x128xf32, #tpu.memory_space<vmem>>, %arg6: memref<16x128xbf16, #tpu.memory_space<vmem>>, %arg7: memref<128x128xbf16, #tpu.memory_space<vmem>>, %arg8: memref<16x128xf32, #tpu.memory_space<vmem>>, %arg9: memref<16x128xf32, #tpu.memory_space<vmem>>) attributes {dimension_semantics = [#tpu.dimension_semantics<parallel>, #tpu.dimension_semantics<parallel>, #tpu.dimension_semantics<arbitrary>], iteration_bounds = array<i64: 1, 3, 2>, scalar_prefetch = 0 : i64, scratch_operands = 1 : i64, tpu.core_type = #tpu.core_type<tc>, window_params = [{transform_indices = @transform_0, window_bounds = array<i64: 16, 256>}, {transform_indices = @transform_1, window_bounds = array<i64: 256, 128>}, {transform_indices = @transform_2, window_bounds = array<i64: 1, 128>}, {transform_indices = @transform_3, window_bounds = array<i64: 16, 128>}, {transform_indices = @transform_4, window_bounds = array<i64: 128, 128>}, {transform_indices = @transform_5, window_bounds = array<i64: 16, 128>}]} {
    %c0_i32 = arith.constant 0 : i32
    %0 = arith.cmpi eq, %arg2, %c0_i32 : i32
    %1 = arith.extui %0 : i1 to i32
    %c0_i32_0 = arith.constant 0 : i32
    %2 = arith.cmpi ne, %1, %c0_i32_0 : i32
    scf.if %2 {
      %cst_9 = arith.constant 0.000000e+00 : f32
      %12 = vector.broadcast %cst_9 : f32 to vector<16x128xf32>
      %c0_10 = arith.constant 0 : index
      %c0_11 = arith.constant 0 : index
      %13 = vector.load %arg9[%c0_10, %c0_11] : memref<16x128xf32, #tpu.memory_space<vmem>>, vector<16x128xf32>
      tpu.vector_store %arg9[%c0_10, %c0_11], %12 {strides = array<i32>} : memref<16x128xf32, #tpu.memory_space<vmem>>, vector<16x128xf32>,
    } else {
    }
    %c0 = arith.constant 0 : index
    %c0_1 = arith.constant 0 : index
    %3 = vector.load %arg9[%c0, %c0_1] : memref<16x128xf32, #tpu.memory_space<vmem>>, vector<16x128xf32>
    %c0_2 = arith.constant 0 : index
    %c0_3 = arith.constant 0 : index
    %4 = vector.load %arg3[%c0_2, %c0_3] : memref<16x256xbf16, #tpu.memory_space<vmem>>, vector<16x256xbf16>
    %c0_4 = arith.constant 0 : index
    %c0_5 = arith.constant 0 : index
    %5 = vector.load %arg4[%c0_4, %c0_5] : memref<256x128xbf16, #tpu.memory_space<vmem>>, vector<256x128xbf16>
    %cst = arith.constant dense<0.000000e+00> : vector<16x128xf32>
    %6 = tpu.matmul %4, %5, %cst {dimension_numbers = #tpu.dot_dimension_numbers<[1], [0], [0], [1], [0, 0, 1, 1], [], []>} : vector<16x256xbf16>, vector<256x128xbf16>, vector<16x128xf32> -> vector<16x128xf32>
    %7 = arith.addf %3, %6 : vector<16x128xf32>
    %c0_6 = arith.constant 0 : index
    %c0_7 = arith.constant 0 : index
    %8 = vector.load %arg9[%c0_6, %c0_7] : memref<16x128xf32, #tpu.memory_space<vmem>>, vector<16x128xf32>
    tpu.vector_store %arg9[%c0_6, %c0_7], %7 {strides = array<i32>} : memref<16x128xf32, #tpu.memory_space<vmem>>, vector<16x128xf32>,
    %c1_i32 = arith.constant 1 : i32
    %9 = arith.cmpi eq, %arg2, %c1_i32 : i32
    %10 = arith.extui %9 : i1 to i32
    %c0_i32_8 = arith.constant 0 : i32
    %11 = arith.cmpi ne, %10, %c0_i32_8 : i32
    scf.if %11 {
      %c0_9 = arith.constant 0 : index
      %c0_10 = arith.constant 0 : index
      %12 = vector.load %arg6[%c0_9, %c0_10] : memref<16x128xbf16, #tpu.memory_space<vmem>>, vector<16x128xbf16>
      %c0_11 = arith.constant 0 : index
      %c0_12 = arith.constant 0 : index
      %13 = vector.load %arg7[%c0_11, %c0_12] : memref<128x128xbf16, #tpu.memory_space<vmem>>, vector<128x128xbf16>
      %cst_13 = arith.constant dense<0.000000e+00> : vector<16x128xf32>
      %14 = tpu.matmul %12, %13, %cst_13 {dimension_numbers = #tpu.dot_dimension_numbers<[1], [0], [0], [1], [0, 0, 1, 1], [], []>} : vector<16x128xbf16>, vector<128x128xbf16>, vector<16x128xf32> -> vector<16x128xf32>
      %c0_14 = arith.constant 0 : index
      %c0_15 = arith.constant 0 : index
      %15 = vector.load %arg9[%c0_14, %c0_15] : memref<16x128xf32, #tpu.memory_space<vmem>>, vector<16x128xf32>
      %c0_16 = arith.constant 0 : index
      %c0_17 = arith.constant 0 : index
      %16 = vector.load %arg5[%c0_16, %c0_17] : memref<1x128xf32, #tpu.memory_space<vmem>>, vector<1x128xf32>
      %17 = vector.broadcast %16 : vector<1x128xf32> to vector<16x128xf32>
      %18 = arith.addf %15, %17 : vector<16x128xf32>
      %19 = arith.addf %18, %14 : vector<16x128xf32>
      %c0_18 = arith.constant 0 : index
      %c0_19 = arith.constant 0 : index
      %20 = vector.load %arg8[%c0_18, %c0_19] : memref<16x128xf32, #tpu.memory_space<vmem>>, vector<16x128xf32>
      tpu.vector_store %arg8[%c0_18, %c0_19], %19 {strides = array<i32>} : memref<16x128xf32, #tpu.memory_space<vmem>>, vector<16x128xf32>,
    } else {
    }
    return
  }
  func.func @transform_0(%arg0: i32, %arg1: i32, %arg2: i32) -> (i32, i32) {
    %c0_i32 = arith.constant 0 : i32
    return %arg0, %arg2 : i32, i32
  }
  func.func @transform_1(%arg0: i32, %arg1: i32, %arg2: i32) -> (i32, i32) {
    %c0_i32 = arith.constant 0 : i32
    return %arg2, %arg1 : i32, i32
  }
  func.func @transform_2(%arg0: i32, %arg1: i32, %arg2: i32) -> (i32, i32) {
    %c0_i32 = arith.constant 0 : i32
    %c0_i32_0 = arith.constant 0 : i32
    return %c0_i32, %arg1 : i32, i32
  }
  func.func @transform_3(%arg0: i32, %arg1: i32, %arg2: i32) -> (i32, i32) {
    %c0_i32 = arith.constant 0 : i32
    %c0_i32_0 = arith.constant 0 : i32
    return %arg0, %c0_i32 : i32, i32
  }
  func.func @transform_4(%arg0: i32, %arg1: i32, %arg2: i32) -> (i32, i32) {
    %c0_i32 = arith.constant 0 : i32
    %c0_i32_0 = arith.constant 0 : i32
    return %c0_i32, %arg1 : i32, i32
  }
  func.func @transform_5(%arg0: i32, %arg1: i32, %arg2: i32) -> (i32, i32) {
    %c0_i32 = arith.constant 0 : i32
    return %arg0, %arg1 : i32, i32
  }
}

</mosaic_0001>

<llo_original>
// kernel: tpu_custom_call.1
$region0: #{tpu_custom_call.1}
  #allocation0 [shape = 'u32[]', space=smem, size = 0x4, offset = 0x4, fixed_abs, tag = 'smem constant byte address 0x4 - core index']
  #allocation1 [shape = 'u32[144,128]{1,0:T(1,128)}', space=vmem, size = 0x12000, scoped, tag = 'internal scratch']
  #allocation2 [shape = 'f32[16,128]{1,0:T(8,128)}', space=vmem, size = 0x2000, scoped, tag = 'scratch operand']
  %s0 = inlined_call_operand.hbm [shape: bf16[16,512], index: 0, kind: input, shape index: {}]
  %s1 = inlined_call_operand.hbm [shape: bf16[512,384], index: 1, kind: input, shape index: {}]
  %s2 = inlined_call_operand.vmem [shape: f32[1,384], index: 2, kind: input, shape index: {}]
  %s3 = inlined_call_operand.vmem [shape: bf16[16,128], index: 3, kind: input, shape index: {}]
  %s4 = inlined_call_operand.hbm [shape: bf16[128,384], index: 4, kind: input, shape index: {}]
  %s5 = inlined_call_operand.hbm [shape: f32[16,384], index: 5, kind: output, shape index: {}]
  %s6 = sld [smem:[#allocation0]]
  $region73: #{tpu_custom_call.1} parent=0
    _
  %s8 = ssub.s32 1, %s6
  %s9 = scalar_select 0, %s8, %s6
  $region1: #{tpu_custom_call.1} parent=0
    #allocation3 [shape = 'u8[16384]{0}', space=vmem, size = 0x4000, scoped, tag = 'input window, operand 0']
    #allocation4 [shape = 's32[2]{0}', space=sflag, size = 0x8, scoped, tag = 'scoped memory for tpu_custom_call.1']
    #allocation5 [shape = 's32[2]{0}', space=sflag, size = 0x8, scoped, tag = 'scoped memory for tpu_custom_call.1']
    #allocation6 [shape = 'u8[131072]{0}', space=vmem, size = 0x20000, scoped, tag = 'input window, operand 1']
    #allocation7 [shape = 's32[2]{0}', space=sflag, size = 0x8, scoped, tag = 'scoped memory for tpu_custom_call.1']
    #allocation8 [shape = 'u8[65536]{0}', space=vmem, size = 0x10000, scoped, tag = 'input window, operand 4']
    #allocation9 [shape = 'u8[16384]{0}', space=vmem, size = 0x4000, scoped, tag = 'output window, operand 0']
    %10 = vsyncpa [#allocation4], 0
    %s11 = scalar_lea.sflag [#allocation4], 1
    %12 = vsyncpa %s11, 0
    %13 = vsyncpa [#allocation7], 0
    %s14 = scalar_lea.sflag [#allocation7], 1
    %15 = vsyncpa %s14, 0
    %16 = vsyncpa [#allocation5], 0
    %s17 = scalar_lea.sflag [#allocation5], 1
    %18 = vsyncpa %s17, 0
    loop: start=0, step=1, limit=8
    $region2: #{tpu_custom_call.1} parent=1 // loop_pre_header
      _
    $region3: #{tpu_custom_call.1} parent=1 // loop_header
      %s20 = sphi 0, %s24
      %p21 = scmp.ge.s32.totalorder %s20, 8
      %s27 = sphi 0, %s46
      %s28 = sphi 0, %s42
      %s29 = sphi 0, %s38
      %s30 = sphi 0, %s27
      %s31 = sphi 0, %s28
      %s32 = sphi 0, %s29
      %s33 = sphi 0, %s30
      %s34 = sphi 0, %s31
      %s35 = sphi 0, %s32
      %s51 = sphi 0, %s53
      %s54 = sphi 0, %s51
      %s55 = sphi 0, %s54
      %s71 = sphi 0, %s55
      %s79 = sphi 0, %s81
      %s82 = sphi 0, %s79
      %s83 = sphi 0, %s82
      %s99 = sphi 0, %s83
      %s105 = sphi 0, %s107
      %s108 = sphi 0, %s105
      %s109 = sphi 0, %s108
      %s125 = sphi 0, %s109
      %s131 = sphi 0, %s133
      %s134 = sphi 0, %s131
      %s135 = sphi 0, %s134
      %s151 = sphi 0, %s135
      %s157 = sphi 0, %s159
      %s160 = sphi 0, %s157
      %s161 = sphi 0, %s160
      %s177 = sphi 0, %s161
      %s185 = sphi 0, %s187
      %s188 = sphi 0, %s185
      %s189 = sphi 0, %s188
      %s205 = sphi 0, %s189
    $region4: #{tpu_custom_call.1} parent=1 // loop_header_branch
      %23 = sbr.rel (%p21) target = $region8
    $region5: #{tpu_custom_call.1} parent=1 // loop_body
      %s25 = ssub.s32 %s20, 1
      %s26 = ssub.s32 %s20, 2
      %s36 = sadd.s32 1, %s29
      %p37 = scmp.ge.s32.totalorder %s36, 2
      %s38 = scalar_select %p37, 0, %s36
      %s39 = sadd.s32 1, %s28
      %s40 = scalar_select %p37, %s39, %s28
      %p41 = scmp.ge.s32.totalorder %s40, 3
      %s42 = scalar_select %p41, 0, %s40
      %s43 = sadd.s32 1, %s27
      %s44 = scalar_select %p41, %s43, %s27
      %p45 = scmp.ge.s32.totalorder %s44, 1
      %s46 = scalar_select %p45, 0, %s44
      %s47 = ssub.s32 %s27, %s46
      %s48 = ssub.s32 %s29, %s38
      %s49 = sor.u32 %s47, %s48
      %p50 = scmp.eq.s32.totalorder %s49, 0
      %s52 = sadd.s32 %s51, 1
      %s53 = scalar_select %p50, %s51, %s52
      %p56 = pneg %p50
      %p57 = scmp.eq.s32.totalorder %s20, 5
      %p58 = por %p56, %p57
      %p59 = scmp.ne.s32.totalorder %s51, %s54
      %p60 = scmp.eq.s32.totalorder %s20, 0
      %p61 = por %p59, %p60
      %p62 = scmp.ne.s32.totalorder %s51, %s54
      %p63 = scmp.eq.s32.totalorder %s25, 5
      %p64 = por %p62, %p63
      %p65 = scmp.ne.s32.totalorder %s54, %s55
      %p66 = scmp.eq.s32.totalorder %s25, 0
      %p67 = por %p65, %p66
      %p68 = scmp.ne.s32.totalorder %s54, %s55
      %p69 = scmp.eq.s32.totalorder %s26, 5
      %p70 = por %p68, %p69
      %p72 = scmp.ne.s32.totalorder %s55, %s71
      %p73 = scmp.eq.s32.totalorder %s26, 0
      %p74 = por %p72, %p73
      %s75 = ssub.s32 %s29, %s38
      %s76 = ssub.s32 %s28, %s42
      %s77 = sor.u32 %s75, %s76
      %p78 = scmp.eq.s32.totalorder %s77, 0
      %s80 = sadd.s32 %s79, 1
      %s81 = scalar_select %p78, %s79, %s80
      %p84 = pneg %p78
      %p85 = scmp.eq.s32.totalorder %s20, 5
      %p86 = por %p84, %p85
      %p87 = scmp.ne.s32.totalorder %s79, %s82
      %p88 = scmp.eq.s32.totalorder %s20, 0
      %p89 = por %p87, %p88
      %p90 = scmp.ne.s32.totalorder %s79, %s82
      %p91 = scmp.eq.s32.totalorder %s25, 5
      %p92 = por %p90, %p91
      %p93 = scmp.ne.s32.totalorder %s82, %s83
      %p94 = scmp.eq.s32.totalorder %s25, 0
      %p95 = por %p93, %p94
      %p96 = scmp.ne.s32.totalorder %s82, %s83
      %p97 = scmp.eq.s32.totalorder %s26, 5
      %p98 = por %p96, %p97
      %p100 = scmp.ne.s32.totalorder %s83, %s99
      %p101 = scmp.eq.s32.totalorder %s26, 0
      %p102 = por %p100, %p101
      %s103 = ssub.s32 %s28, %s42
      %p104 = scmp.eq.s32.totalorder %s103, 0
      %s106 = sadd.s32 %s105, 1
      %s107 = scalar_select %p104, %s105, %s106
      %p110 = pneg %p104
      %p111 = scmp.eq.s32.totalorder %s20, 5
      %p112 = por %p110, %p111
      %p113 = scmp.ne.s32.totalorder %s105, %s108
      %p114 = scmp.eq.s32.totalorder %s20, 0
      %p115 = por %p113, %p114
      %p116 = scmp.ne.s32.totalorder %s105, %s108
      %p117 = scmp.eq.s32.totalorder %s25, 5
      %p118 = por %p116, %p117
      %p119 = scmp.ne.s32.totalorder %s108, %s109
      %p120 = scmp.eq.s32.totalorder %s25, 0
      %p121 = por %p119, %p120
      %p122 = scmp.ne.s32.totalorder %s108, %s109
      %p123 = scmp.eq.s32.totalorder %s26, 5
      %p124 = por %p122, %p123
      %p126 = scmp.ne.s32.totalorder %s109, %s125
      %p127 = scmp.eq.s32.totalorder %s26, 0
      %p128 = por %p126, %p127
      %s129 = ssub.s32 %s27, %s46
      %p130 = scmp.eq.s32.totalorder %s129, 0
      %s132 = sadd.s32 %s131, 1
      %s133 = scalar_select %p130, %s131, %s132
      %p136 = pneg %p130
      %p137 = scmp.eq.s32.totalorder %s20, 5
      %p138 = por %p136, %p137
      %p139 = scmp.ne.s32.totalorder %s131, %s134
      %p140 = scmp.eq.s32.totalorder %s20, 0
      %p141 = por %p139, %p140
      %p142 = scmp.ne.s32.totalorder %s131, %s134
      %p143 = scmp.eq.s32.totalorder %s25, 5
      %p144 = por %p142, %p143
      %p145 = scmp.ne.s32.totalorder %s134, %s135
      %p146 = scmp.eq.s32.totalorder %s25, 0
      %p147 = por %p145, %p146
      %p148 = scmp.ne.s32.totalorder %s134, %s135
      %p149 = scmp.eq.s32.totalorder %s26, 5
      %p150 = por %p148, %p149
      %p152 = scmp.ne.s32.totalorder %s135, %s151
      %p153 = scmp.eq.s32.totalorder %s26, 0
      %p154 = por %p152, %p153
      %s155 = ssub.s32 %s28, %s42
      %p156 = scmp.eq.s32.totalorder %s155, 0
      %s158 = sadd.s32 %s157, 1
      %s159 = scalar_select %p156, %s157, %s158
      %p162 = pneg %p156
      %p163 = scmp.eq.s32.totalorder %s20, 5
      %p164 = por %p162, %p163
      %p165 = scmp.ne.s32.totalorder %s157, %s160
      %p166 = scmp.eq.s32.totalorder %s20, 0
      %p167 = por %p165, %p166
      %p168 = scmp.ne.s32.totalorder %s157, %s160
      %p169 = scmp.eq.s32.totalorder %s25, 5
      %p170 = por %p168, %p169
      %p171 = scmp.ne.s32.totalorder %s160, %s161
      %p172 = scmp.eq.s32.totalorder %s25, 0
      %p173 = por %p171, %p172
      %p174 = scmp.ne.s32.totalorder %s160, %s161
      %p175 = scmp.eq.s32.totalorder %s26, 5
      %p176 = por %p174, %p175
      %p178 = scmp.ne.s32.totalorder %s161, %s177
      %p179 = scmp.eq.s32.totalorder %s26, 0
      %p180 = por %p178, %p179
      %s181 = ssub.s32 %s27, %s46
      %s182 = ssub.s32 %s28, %s42
      %s183 = sor.u32 %s181, %s182
      %p184 = scmp.eq.s32.totalorder %s183, 0
      %s186 = sadd.s32 %s185, 1
      %s187 = scalar_select %p184, %s185, %s186
      %p190 = pneg %p184
      %p191 = scmp.eq.s32.totalorder %s20, 5
      %p192 = por %p190, %p191
      %p193 = scmp.ne.s32.totalorder %s185, %s188
      %p194 = scmp.eq.s32.totalorder %s20, 0
      %p195 = por %p193, %p194
      %p196 = scmp.ne.s32.totalorder %s185, %s188
      %p197 = scmp.eq.s32.totalorder %s25, 5
      %p198 = por %p196, %p197
      %p199 = scmp.ne.s32.totalorder %s188, %s189
      %p200 = scmp.eq.s32.totalorder %s25, 0
      %p201 = por %p199, %p200
      %p202 = scmp.ne.s32.totalorder %s188, %s189
      %p203 = scmp.eq.s32.totalorder %s26, 5
      %p204 = por %p202, %p203
      %p206 = scmp.ne.s32.totalorder %s189, %s205
      %p207 = scmp.eq.s32.totalorder %s26, 0
      %p208 = por %p206, %p207
      %p209 = scmp.le.s32.totalorder 1, %s20
      %p210 = scmp.lt.s32.totalorder %s20, 7
      %p211 = pnand %p209, %p210
      %p212 = pneg %p211
      // Predicated region
      $region9: #{tpu_custom_call.1} parent=5 // pred_check
        _
      $region10: #{tpu_custom_call.1} parent=5 // pred_check_branch
        %214 = sbr.rel (%p211) target = $region12
      $region11: #{tpu_custom_call.1} parent=5 // pred_region
        %s215 = ssub.s32 %s20, 1
        // Predicated region
        $region13: #{tpu_custom_call.1} parent=11 // pred_check
          %p216 = pneg %p147
        $region14: #{tpu_custom_call.1} parent=11 // pred_check_branch
          %218 = sbr.rel (%p216) target = $region16
        $region15: #{tpu_custom_call.1} parent=11 // pred_region
          %s219 = smul.u32 2, %s30
          %p220 = scmp.lt.s32.totalorder %s219, 1
          %s221 = scalar_select %p220, %s219, 1
          %s222 = smul.addr %s221, 4
          %s223 = scalar_lea.vmem %s3, %s222
          %s224 = smul.u32 2, %s30
        $region16: #{tpu_custom_call.1} parent=11 // pred_fallthru
          _
      $region12: #{tpu_custom_call.1} parent=5 // pred_fallthru
        _
      %p225 = scmp.lt.s32.totalorder %s20, 6
      // Predicated region
      $region17: #{tpu_custom_call.1} parent=5 // pred_check
        %p226 = pneg %p225
      $region18: #{tpu_custom_call.1} parent=5 // pred_check_branch
        %228 = sbr.rel (%p226) target = $region20
      $region19: #{tpu_custom_call.1} parent=5 // pred_region
        // Predicated region
        $region21: #{tpu_custom_call.1} parent=19 // pred_check
          %p229 = pneg %p61
        $region22: #{tpu_custom_call.1} parent=19 // pred_check_branch
          %231 = sbr.rel (%p229) target = $region24
        $region23: #{tpu_custom_call.1} parent=19 // pred_region
          %s232 = sand.u32 %s51, 1
          %s233 = scalar_lea.sflag [#allocation4], %s232
          %s234 = sand.u32 %s51, 1
          %s235 = smul.addr %s234, 16
          %s236 = scalar_lea.vmem [#allocation3], %s235
          %s237 = smul.u32 2, %s27
          %s238 = smul.u32 2, %s29
          %s240 = ssub.s32 256, 256
          %241 = vsyncadd %s233, %s240
          %s242 = smul.addr %s237, 4
          %s243 = sadd.s32 %s238, %s242
          %s244 = smul.addr %s243, 64
          %s245 = scalar_lea.hbm %s0, %s244
          %s246 = sshll.u32 %s236, 4
          %s247 = int_to_ptr.vmem [resolvable:$true] %s246
          %252 = dma.hbm_to_vmem [thread:$0]  %s245, 256, %s247, %s233, 256, 128, 8
        $region24: #{tpu_custom_call.1} parent=19 // pred_fallthru
          _
        // Predicated region
        $region25: #{tpu_custom_call.1} parent=19 // pred_check
          %p253 = pneg %p89
        $region26: #{tpu_custom_call.1} parent=19 // pred_check_branch
          %255 = sbr.rel (%p253) target = $region28
        $region27: #{tpu_custom_call.1} parent=19 // pred_region
          %s256 = sand.u32 %s20, 1
          %s257 = scalar_lea.sflag [#allocation7], %s256
          %s258 = sand.u32 %s79, 1
          %s259 = smul.addr %s258, 128
          %s260 = scalar_lea.vmem [#allocation6], %s259
          %s261 = smul.u32 32, %s29
          %s263 = ssub.s32 2048, 2048
          %264 = vsyncadd %s257, %s263
          %s265 = smul.addr %s261, 3
          %s266 = sadd.s32 %s28, %s265
          %s267 = smul.addr %s266, 64
          %s268 = scalar_lea.hbm %s1, %s267
          %s269 = sshll.u32 %s260, 4
          %s270 = int_to_ptr.vmem [resolvable:$true] %s269
          %275 = dma.hbm_to_vmem [thread:$0]  %s268, 2048, %s270, %s257, 192, 64, 4
        $region28: #{tpu_custom_call.1} parent=19 // pred_fallthru
          _
        // Predicated region
        $region29: #{tpu_custom_call.1} parent=19 // pred_check
          %p276 = pneg %p115
        $region30: #{tpu_custom_call.1} parent=19 // pred_check_branch
          %278 = sbr.rel (%p276) target = $region32
        $region31: #{tpu_custom_call.1} parent=19 // pred_region
          %p279 = scmp.lt.s32.totalorder %s28, 2
          %s280 = scalar_select %p279, %s28, 2
          %s281 = scalar_lea.vmem %s2, %s280
        $region32: #{tpu_custom_call.1} parent=19 // pred_fallthru
          _
        // Predicated region
        $region33: #{tpu_custom_call.1} parent=19 // pred_check
          %p282 = pneg %p167
        $region34: #{tpu_custom_call.1} parent=19 // pred_check_branch
          %284 = sbr.rel (%p282) target = $region36
        $region35: #{tpu_custom_call.1} parent=19 // pred_region
          %s285 = sand.u32 %s20, 1
          %s286 = scalar_lea.sflag [#allocation7], %s285
          %s287 = sand.u32 %s157, 1
          %s288 = smul.addr %s287, 64
          %s289 = scalar_lea.vmem [#allocation8], %s288
          %s291 = ssub.s32 1024, 1024
          %292 = vsyncadd %s286, %s291
          %s293 = smul.addr %s28, 64
          %s294 = scalar_lea.hbm %s4, %s293
          %s295 = sshll.u32 %s289, 4
          %s296 = int_to_ptr.vmem [resolvable:$true] %s295
          %301 = dma.hbm_to_vmem [thread:$0]  %s294, 1024, %s296, %s286, 192, 64, 4
        $region36: #{tpu_custom_call.1} parent=19 // pred_fallthru
          _
      $region20: #{tpu_custom_call.1} parent=5 // pred_fallthru
        _
      %p302 = scmp.le.s32.totalorder 1, %s20
      %p303 = scmp.lt.s32.totalorder %s20, 7
      %p304 = pnand %p302, %p303
      %p305 = pneg %p304
      // Predicated region
      $region37: #{tpu_custom_call.1} parent=5 // pred_check
        _
      $region38: #{tpu_custom_call.1} parent=5 // pred_check_branch
        %307 = sbr.rel (%p304) target = $region40
      $region39: #{tpu_custom_call.1} parent=5 // pred_region
        %s308 = ssub.s32 %s20, 1
        %s309 = sand.u32 %s54, 1
        %s310 = scalar_lea.sflag [#allocation4], %s309
        %s311 = sand.u32 %s54, 1
        %s312 = smul.addr %s311, 16
        %s313 = scalar_lea.vmem [#allocation3], %s312
        // Predicated region
        $region41: #{tpu_custom_call.1} parent=39 // pred_check
          %p314 = pneg %p67
        $region42: #{tpu_custom_call.1} parent=39 // pred_check_branch
          %316 = sbr.rel (%p314) target = $region44
        $region43: #{tpu_custom_call.1} parent=39 // pred_region
          %317 = dma.done %s310, 256
        $region44: #{tpu_custom_call.1} parent=39 // pred_fallthru
          _
        %s318 = sand.u32 %s25, 1
        %s319 = scalar_lea.sflag [#allocation7], %s318
        %s320 = sand.u32 %s82, 1
        %s321 = smul.addr %s320, 128
        %s322 = scalar_lea.vmem [#allocation6], %s321
        // Predicated region
        $region45: #{tpu_custom_call.1} parent=39 // pred_check
          %p323 = pneg %p95
        $region46: #{tpu_custom_call.1} parent=39 // pred_check_branch
          %325 = sbr.rel (%p323) target = $region48
        $region47: #{tpu_custom_call.1} parent=39 // pred_region
          %326 = dma.done %s319, 2048
        $region48: #{tpu_custom_call.1} parent=39 // pred_fallthru
          _
        %s327 = sand.u32 %s25, 1
        %s328 = scalar_lea.sflag [#allocation7], %s327
        %s329 = sand.u32 %s160, 1
        %s330 = smul.addr %s329, 64
        %s331 = scalar_lea.vmem [#allocation8], %s330
        // Predicated region
        $region49: #{tpu_custom_call.1} parent=39 // pred_check
          %p332 = pneg %p173
        $region50: #{tpu_custom_call.1} parent=39 // pred_check_branch
          %334 = sbr.rel (%p332) target = $region52
        $region51: #{tpu_custom_call.1} parent=39 // pred_region
          %335 = dma.done %s328, 1024
        $region52: #{tpu_custom_call.1} parent=39 // pred_fallthru
          _
        %s336 = sand.u32 %s54, 1
        %s337 = scalar_lea.sflag [#allocation4], %s336
        %s338 = sand.u32 %s54, 1
        %s339 = smul.addr %s338, 16
        %s340 = scalar_lea.vmem [#allocation3], %s339
        %p341 = pneg %p67
        %p342 = pneg %p64
        %s343 = sand.u32 %s25, 1
        %s344 = scalar_lea.sflag [#allocation7], %s343
        %s345 = sand.u32 %s82, 1
        %s346 = smul.addr %s345, 128
        %s347 = scalar_lea.vmem [#allocation6], %s346
        %p348 = pneg %p95
        %p349 = pneg %p92
        %p350 = scmp.lt.s32.totalorder %s31, 2
        %s351 = scalar_select %p350, %s31, 2
        %s352 = scalar_lea.vmem %s2, %s351
        %p353 = pneg %p121
        %p354 = pneg %p118
        %s355 = smul.u32 2, %s30
        %p356 = scmp.lt.s32.totalorder %s355, 1
        %s357 = scalar_select %p356, %s355, 1
        %s358 = smul.addr %s357, 4
        %s359 = scalar_lea.vmem %s3, %s358
        %p360 = pneg %p147
        %p361 = pneg %p144
        %s362 = sand.u32 %s25, 1
        %s363 = scalar_lea.sflag [#allocation7], %s362
        %s364 = sand.u32 %s160, 1
        %s365 = smul.addr %s364, 64
        %s366 = scalar_lea.vmem [#allocation8], %s365
        %p367 = pneg %p173
        %p368 = pneg %p170
        %p369 = pneg %p201
        %p370 = pneg %p198
        %s371 = sand.u32 %s188, 1
        %s372 = scalar_lea.sflag [#allocation5], %s371
        %s373 = sand.u32 %s188, 1
        %s374 = smul.addr %s373, 16
        %s375 = scalar_lea.vmem [#allocation9], %s374
        %s376 = smul.u32 2, %s30
        %s377 = smul.u32 2, %s32
        %s378 = smul.u32 32, %s32
        %p379 = scmp.lt.s32.totalorder %s31, 2
        %s380 = scalar_select %p379, %s31, 2
        %s381 = scalar_lea.vmem %s2, %s380
        %s382 = smul.u32 2, %s30
        %p383 = scmp.lt.s32.totalorder %s382, 1
        %s384 = scalar_select %p383, %s382, 1
        %s385 = smul.addr %s384, 4
        %s386 = scalar_lea.vmem %s3, %s385
        %s387 = smul.u32 2, %s30
        %s388 = smul.u32 2, %s30
        %p390 = scmp.eq.s32.totalorder %s32, 0
        // Predicated region
        $region53: #{tpu_custom_call.1} parent=39 // pred_check
          %p391 = pneg %p390
        $region54: #{tpu_custom_call.1} parent=39 // pred_check_branch
          %393 = sbr.rel (%p391) target = $region56
        $region55: #{tpu_custom_call.1} parent=39 // pred_region
          %394 = vst [vmem:[#allocation2] sm:$0xff] 0.0
          %395 = vst [vmem:[#allocation2 + $0x8] sm:$0xff] 0.0
        $region56: #{tpu_custom_call.1} parent=39 // pred_fallthru
          _
        %v396 = vld [vmem:[#allocation2] sm:$0xff]
        %v397 = vld [vmem:[#allocation2 + $0x8] sm:$0xff]
        %v398 = vld [vmem:[%s313] sm:$0xff]
        %v399 = vld [vmem:[%s313 + $0x8] sm:$0xff]
        %v400 = vld [vmem:[%s322] sm:$0xf]
        %v401 = vld [vmem:[%s322 + $0x4] sm:$0xf]
        %v402 = vld [vmem:[%s322 + $0x8] sm:$0xf]
        %v403 = vld [vmem:[%s322 + $0xc] sm:$0xf]
        %v404 = vld [vmem:[%s322 + $0x10] sm:$0xf]
        %v405 = vld [vmem:[%s322 + $0x14] sm:$0xf]
        %v406 = vld [vmem:[%s322 + $0x18] sm:$0xf]
        %v407 = vld [vmem:[%s322 + $0x1c] sm:$0xf]
        %v408 = vld [vmem:[%s322 + $0x20] sm:$0xf]
        %v409 = vld [vmem:[%s322 + $0x24] sm:$0xf]
        %v410 = vld [vmem:[%s322 + $0x28] sm:$0xf]
        %v411 = vld [vmem:[%s322 + $0x2c] sm:$0xf]
        %v412 = vld [vmem:[%s322 + $0x30] sm:$0xf]
        %v413 = vld [vmem:[%s322 + $0x34] sm:$0xf]
        %v414 = vld [vmem:[%s322 + $0x38] sm:$0xf]
        %v415 = vld [vmem:[%s322 + $0x3c] sm:$0xf]
        %v416 = vld [vmem:[%s322 + $0x40] sm:$0xf]
        %v417 = vld [vmem:[%s322 + $0x44] sm:$0xf]
        %v418 = vld [vmem:[%s322 + $0x48] sm:$0xf]
        %v419 = vld [vmem:[%s322 + $0x4c] sm:$0xf]
        %v420 = vld [vmem:[%s322 + $0x50] sm:$0xf]
        %v421 = vld [vmem:[%s322 + $0x54] sm:$0xf]
        %v422 = vld [vmem:[%s322 + $0x58] sm:$0xf]
        %v423 = vld [vmem:[%s322 + $0x5c] sm:$0xf]
        %v424 = vld [vmem:[%s322 + $0x60] sm:$0xf]
        %v425 = vld [vmem:[%s322 + $0x64] sm:$0xf]
        %v426 = vld [vmem:[%s322 + $0x68] sm:$0xf]
        %v427 = vld [vmem:[%s322 + $0x6c] sm:$0xf]
        %v428 = vld [vmem:[%s322 + $0x70] sm:$0xf]
        %v429 = vld [vmem:[%s322 + $0x74] sm:$0xf]
        %v430 = vld [vmem:[%s322 + $0x78] sm:$0xf]
        %v431 = vld [vmem:[%s322 + $0x7c] sm:$0xf]
        %v434 = vunpack.c.l.b16 %v398
        %v435 = vunpack.c.h.b16 %v398
        %v436 = vunpack.c.l.b16 %v399
        %v437 = vunpack.c.h.b16 %v399
        %v438 = vpack.c.b16 %v436, %v434
        %v439 = vpack.c.b16 %v437, %v435
        %v474 = vunpack.c.l.b16 %v400
        %v475 = vunpack.c.l.b16 %v401
        %v476 = vunpack.c.l.b16 %v402
        %v477 = vunpack.c.l.b16 %v403
        %v478 = vunpack.c.l.b16 %v404
        %v479 = vunpack.c.l.b16 %v405
        %v480 = vunpack.c.l.b16 %v406
        %v481 = vunpack.c.l.b16 %v407
        %v482 = vunpack.c.l.b16 %v408
        %v483 = vunpack.c.l.b16 %v409
        %v484 = vunpack.c.l.b16 %v410
        %v485 = vunpack.c.l.b16 %v411
        %v486 = vunpack.c.l.b16 %v412
        %v487 = vunpack.c.l.b16 %v413
        %v488 = vunpack.c.l.b16 %v414
        %v489 = vunpack.c.l.b16 %v415
        %v490 = vunpack.c.l.b16 %v416
        %v491 = vunpack.c.l.b16 %v417
        %v492 = vunpack.c.l.b16 %v418
        %v493 = vunpack.c.l.b16 %v419
        %v494 = vunpack.c.l.b16 %v420
        %v495 = vunpack.c.l.b16 %v421
        %v496 = vunpack.c.l.b16 %v422
        %v497 = vunpack.c.l.b16 %v423
        %v498 = vunpack.c.l.b16 %v424
        %v499 = vunpack.c.l.b16 %v425
        %v500 = vunpack.c.l.b16 %v426
        %v501 = vunpack.c.l.b16 %v427
        %v502 = vunpack.c.l.b16 %v428
        %v503 = vunpack.c.l.b16 %v429
        %v504 = vunpack.c.l.b16 %v430
        %v505 = vunpack.c.l.b16 %v431
        %v506 = vpack.c.b16 %v475, %v474
        %v507 = vpack.c.b16 %v477, %v476
        %v508 = vpack.c.b16 %v479, %v478
        %v509 = vpack.c.b16 %v481, %v480
        %v510 = vpack.c.b16 %v483, %v482
        %v511 = vpack.c.b16 %v485, %v484
        %v512 = vpack.c.b16 %v487, %v486
        %v513 = vpack.c.b16 %v489, %v488
        %v514 = vpack.c.b16 %v491, %v490
        %v515 = vpack.c.b16 %v493, %v492
        %v516 = vpack.c.b16 %v495, %v494
        %v517 = vpack.c.b16 %v497, %v496
        %v518 = vpack.c.b16 %v499, %v498
        %v519 = vpack.c.b16 %v501, %v500
        %v520 = vpack.c.b16 %v503, %v502
        %v521 = vpack.c.b16 %v505, %v504
        %538 = vmatprep.subr.bf16.mxu0 0
        %539 = vmatpush1.bf16.msra.mxu0 %v506
        %540 = vmatprep.subr.bf16.mxu0 0
        %541 = vmatpush1.bf16.msra.mxu0 %v507
        %542 = vmatprep.subr.bf16.mxu0 0
        %543 = vmatpush1.bf16.msra.mxu0 %v508
        %544 = vmatprep.subr.bf16.mxu0 0
        %545 = vmatpush1.bf16.msra.mxu0 %v509
        %546 = vmatprep.subr.bf16.mxu0 0
        %547 = vmatpush1.bf16.msra.mxu0 %v510
        %548 = vmatprep.subr.bf16.mxu0 0
        %549 = vmatpush1.bf16.msra.mxu0 %v511
        %550 = vmatprep.subr.bf16.mxu0 0
        %551 = vmatpush1.bf16.msra.mxu0 %v512
        %552 = vmatprep.subr.bf16.mxu0 0
        %553 = vmatpush1.bf16.msra.mxu0 %v513
        %554 = vmatprep.subr.bf16.mxu0 0
        %555 = vmatpush1.bf16.msra.mxu0 %v514
        %556 = vmatprep.subr.bf16.mxu0 0
        %557 = vmatpush1.bf16.msra.mxu0 %v515
        %558 = vmatprep.subr.bf16.mxu0 0
        %559 = vmatpush1.bf16.msra.mxu0 %v516
        %560 = vmatprep.subr.bf16.mxu0 0
        %561 = vmatpush1.bf16.msra.mxu0 %v517
        %562 = vmatprep.subr.bf16.mxu0 0
        %563 = vmatpush1.bf16.msra.mxu0 %v518
        %564 = vmatprep.subr.bf16.mxu0 0
        %565 = vmatpush1.bf16.msra.mxu0 %v519
        %566 = vmatprep.subr.bf16.mxu0 0
        %567 = vmatpush1.bf16.msra.mxu0 %v520
        %568 = vmatprep.subr.bf16.mxu0 0
        %569 = vmatpush1.bf16.msra.mxu0 %v521
        %570 = vmatprep.mubr.bf16.mxu0 %v439
        %571 = vmatmul.mubr.bf16.gmra.mrb[0].mxu0 %v438
        %v572 = vpop.f32.mrb[0].mxu0
        %v573 = vadd.f32 0.0, %v572
        %v574 = vpop.f32.mrb[0].mxu0
        %v575 = vpop.f32.mrb[0].mxu0
        %v576 = vadd.f32 0.0, %v575
        %v577 = vpop.f32.mrb[0].mxu0
        %578 = vdwg.mxu0
        %v579 = vadd.f32 %v396, %v573
        %v580 = vadd.f32 %v397, %v576
        %581 = vst [vmem:[#allocation2] sm:$0xff] %v579
        %582 = vst [vmem:[#allocation2 + $0x8] sm:$0xff] %v580
        %p583 = scmp.eq.s32.totalorder %s32, 1
        // Predicated region
        $region57: #{tpu_custom_call.1} parent=39 // pred_check
          %p584 = pneg %p583
        $region58: #{tpu_custom_call.1} parent=39 // pred_check_branch
          %586 = sbr.rel (%p584) target = $region60
        $region59: #{tpu_custom_call.1} parent=39 // pred_region
          %v587 = vld [vmem:[%s386] sm:$0xf]
          %v588 = vld [vmem:[%s386 + $0x4] sm:$0xf]
          %v589 = vld [vmem:[%s331] sm:$0xf]
          %v590 = vld [vmem:[%s331 + $0x4] sm:$0xf]
          %v591 = vld [vmem:[%s331 + $0x8] sm:$0xf]
          %v592 = vld [vmem:[%s331 + $0xc] sm:$0xf]
          %v593 = vld [vmem:[%s331 + $0x10] sm:$0xf]
          %v594 = vld [vmem:[%s331 + $0x14] sm:$0xf]
          %v595 = vld [vmem:[%s331 + $0x18] sm:$0xf]
          %v596 = vld [vmem:[%s331 + $0x1c] sm:$0xf]
          %v597 = vld [vmem:[%s331 + $0x20] sm:$0xf]
          %v598 = vld [vmem:[%s331 + $0x24] sm:$0xf]
          %v599 = vld [vmem:[%s331 + $0x28] sm:$0xf]
          %v600 = vld [vmem:[%s331 + $0x2c] sm:$0xf]
          %v601 = vld [vmem:[%s331 + $0x30] sm:$0xf]
          %v602 = vld [vmem:[%s331 + $0x34] sm:$0xf]
          %v603 = vld [vmem:[%s331 + $0x38] sm:$0xf]
          %v604 = vld [vmem:[%s331 + $0x3c] sm:$0xf]
          %v607 = vunpack.c.l.b16 %v587
          %v608 = vunpack.c.l.b16 %v588
          %v609 = vpack.c.b16 %v608, %v607
          %v627 = vunpack.c.l.b16 %v589
          %v628 = vunpack.c.l.b16 %v590
          %v629 = vunpack.c.l.b16 %v591
          %v630 = vunpack.c.l.b16 %v592
          %v631 = vunpack.c.l.b16 %v593
          %v632 = vunpack.c.l.b16 %v594
          %v633 = vunpack.c.l.b16 %v595
          %v634 = vunpack.c.l.b16 %v596
          %v635 = vunpack.c.l.b16 %v597
          %v636 = vunpack.c.l.b16 %v598
          %v637 = vunpack.c.l.b16 %v599
          %v638 = vunpack.c.l.b16 %v600
          %v639 = vunpack.c.l.b16 %v601
          %v640 = vunpack.c.l.b16 %v602
          %v641 = vunpack.c.l.b16 %v603
          %v642 = vunpack.c.l.b16 %v604
          %v643 = vpack.c.b16 %v628, %v627
          %v644 = vpack.c.b16 %v630, %v629
          %v645 = vpack.c.b16 %v632, %v631
          %v646 = vpack.c.b16 %v634, %v633
          %v647 = vpack.c.b16 %v636, %v635
          %v648 = vpack.c.b16 %v638, %v637
          %v649 = vpack.c.b16 %v640, %v639
          %v650 = vpack.c.b16 %v642, %v641
          %659 = vmatprep.subr.bf16.mxu0 0
          %660 = vmatpush1.bf16.msra.mxu0 %v643
          %661 = vmatprep.subr.bf16.mxu0 0
          %662 = vmatpush1.bf16.msra.mxu0 %v644
          %663 = vmatprep.subr.bf16.mxu0 0
          %664 = vmatpush1.bf16.msra.mxu0 %v645
          %665 = vmatprep.subr.bf16.mxu0 0
          %666 = vmatpush1.bf16.msra.mxu0 %v646
          %667 = vmatprep.subr.bf16.mxu0 0
          %668 = vmatpush1.bf16.msra.mxu0 %v647
          %669 = vmatprep.subr.bf16.mxu0 0
          %670 = vmatpush1.bf16.msra.mxu0 %v648
          %671 = vmatprep.subr.bf16.mxu0 0
          %672 = vmatpush1.bf16.msra.mxu0 %v649
          %673 = vmatprep.subr.bf16.mxu0 0
          %674 = vmatpush1.bf16.msra.mxu0 %v650
          %675 = vmatprep.subr.bf16.mxu0 0
          %676 = vmatpush1.bf16.msra.mxu0 0
          %677 = vmatprep.subr.bf16.mxu0 0
          %678 = vmatpush1.bf16.msra.mxu0 0
          %679 = vmatprep.subr.bf16.mxu0 0
          %680 = vmatpush1.bf16.msra.mxu0 0
          %681 = vmatprep.subr.bf16.mxu0 0
          %682 = vmatpush1.bf16.msra.mxu0 0
          %683 = vmatprep.subr.bf16.mxu0 0
          %684 = vmatpush1.bf16.msra.mxu0 0
          %685 = vmatprep.subr.bf16.mxu0 0
          %686 = vmatpush1.bf16.msra.mxu0 0
          %687 = vmatprep.subr.bf16.mxu0 0
          %688 = vmatpush1.bf16.msra.mxu0 0
          %689 = vmatprep.subr.bf16.mxu0 0
          %690 = vmatpush1.bf16.msra.mxu0 0
          %691 = vmatprep.mubr.bf16.mxu0 0
          %692 = vmatmul.mubr.bf16.gmra.mrb[0].mxu0 %v609
          %v693 = vpop.f32.mrb[0].mxu0
          %v694 = vadd.f32 0.0, %v693
          %v695 = vpop.f32.mrb[0].mxu0
          %v696 = vpop.f32.mrb[0].mxu0
          %v697 = vadd.f32 0.0, %v696
          %v698 = vpop.f32.mrb[0].mxu0
          %699 = vdwg.mxu0
          %v700 = vld [vmem:[#allocation2] sm:$0xff]
          %v701 = vld [vmem:[#allocation2 + $0x8] sm:$0xff]
          %v702 = vld [vmem:[%s381] sm:$0x1]
          %v704 = vlaneseq
          %v705 = vshrl.u32 %v704, 7
          %v706 = vsub.s32 0, %v705
          %v707 = vrot.slane %v702, %v706
          %v709 = vadd.f32 %v700, %v707
          %v710 = vadd.f32 %v701, %v707
          %v711 = vadd.f32 %v709, %v694
          %v712 = vadd.f32 %v710, %v697
          %713 = vst [vmem:[%s375] sm:$0xff] %v711
          %714 = vst [vmem:[%s375 + $0x8] sm:$0xff] %v712
        $region60: #{tpu_custom_call.1} parent=39 // pred_fallthru
          _
        %s715 = sand.u32 %s188, 1
        %s716 = scalar_lea.sflag [#allocation5], %s715
        %s717 = sand.u32 %s188, 1
        %s718 = smul.addr %s717, 16
        %s719 = scalar_lea.vmem [#allocation9], %s718
        // Predicated region
        $region61: #{tpu_custom_call.1} parent=39 // pred_check
          %p720 = pneg %p198
        $region62: #{tpu_custom_call.1} parent=39 // pred_check_branch
          %722 = sbr.rel (%p720) target = $region64
        $region63: #{tpu_custom_call.1} parent=39 // pred_region
          %s723 = smul.u32 2, %s30
          %s725 = ssub.s32 256, 256
          %726 = vsyncadd %s716, %s725
          %s727 = smul.addr %s723, 3
          %s728 = sadd.s32 %s31, %s727
          %s729 = smul.addr %s728, 128
          %s730 = scalar_lea.hbm %s5, %s729
          %s731 = sshll.u32 %s719, 4
          %s732 = int_to_ptr.vmem [resolvable:$true] %s731
          %737 = dma.vmem_to_hbm [thread:$0]  %s732, 256, %s730, %s716, 128, 384, 8
        $region64: #{tpu_custom_call.1} parent=39 // pred_fallthru
          _
      $region40: #{tpu_custom_call.1} parent=5 // pred_fallthru
        _
      %p738 = scmp.le.s32.totalorder 2, %s20
      // Predicated region
      $region65: #{tpu_custom_call.1} parent=5 // pred_check
        %p739 = pneg %p738
      $region66: #{tpu_custom_call.1} parent=5 // pred_check_branch
        %741 = sbr.rel (%p739) target = $region68
      $region67: #{tpu_custom_call.1} parent=5 // pred_region
        %s742 = ssub.s32 %s20, 2
        // Predicated region
        $region69: #{tpu_custom_call.1} parent=67 // pred_check
          %p743 = pneg %p204
        $region70: #{tpu_custom_call.1} parent=67 // pred_check_branch
          %745 = sbr.rel (%p743) target = $region72
        $region71: #{tpu_custom_call.1} parent=67 // pred_region
          %s746 = sand.u32 %s189, 1
          %s747 = scalar_lea.sflag [#allocation5], %s746
          %s748 = sand.u32 %s189, 1
          %s749 = smul.addr %s748, 16
          %s750 = scalar_lea.vmem [#allocation9], %s749
          %751 = dma.done %s747, 256
        $region72: #{tpu_custom_call.1} parent=67 // pred_fallthru
          _
      $region68: #{tpu_custom_call.1} parent=5 // pred_fallthru
        _
    $region6: #{tpu_custom_call.1} parent=1 // loop_footer
      %s24 = sadd.s32 1, %s20
    $region7: #{tpu_custom_call.1} parent=1 // loop_footer_branch
      %19 = sbr.rel target = $region3
    $region8: #{tpu_custom_call.1} parent=1 // loop_exit
      _
    %752 = vsyncpa [#allocation4], 1
    %s753 = scalar_lea.sflag [#allocation4], 1
    %754 = vsyncpa %s753, 1
    %755 = vsyncpa [#allocation7], 1
    %s756 = scalar_lea.sflag [#allocation7], 1
    %757 = vsyncpa %s756, 1
    %758 = vsyncpa [#allocation5], 1
    %s759 = scalar_lea.sflag [#allocation5], 1
    %760 = vsyncpa %s759, 1

</llo_original>
